<compile_context>
chip_gen: v6e
topology: v6e:2x2x1
jax: 0.10.0
libtpu: 0.0.40
codegen_flags: <defaults>
</compile_context>

<pallas_src>
import jax
import jax.numpy as jnp
from jax import lax
from jax.experimental import pallas as pl
from jax.experimental.pallas import tpu as pltpu


def attention_layer_general(xes, hidden, enc_out, attn_mask, w_attn, w_combine,
                            *, block_b=None, block_t=None, enc_buffers=2,
                            vmem_limit_bytes=None):
    """Pallas implementation of AttentionLayer.forward (attn_type='general').

    xes:       (B, 1, 2E)                       decoder input features
    hidden:    (L, B, H) or tuple (LSTM state)  last layer is used
    enc_out:   (B, T, HD)  (f32 or bf16)        encoder outputs
    attn_mask: (B, T) or None                   nonzero = attend, 0 = masked
    w_attn:    (HD, H)     nn.Linear(hsz, hszXdirs, bias=False).weight
    w_combine: (E, 2E+HD)  nn.Linear(hszXdirs + 2*emb, emb, bias=False).weight
    returns:   (B, 1, E)
    """
    if isinstance(hidden, (tuple, list)):   # LSTM state -> use h
        hidden = hidden[0]

    B, _, twoE = xes.shape
    L, _, H = hidden.shape
    _, T, HD = enc_out.shape
    E, comb_in = w_combine.shape
    assert comb_in == twoE + HD, (comb_in, twoE, HD)
    assert w_attn.shape == (HD, H)

    if attn_mask is None:
        attn_mask = jnp.ones((B, T), dtype=jnp.float32)
    else:
        attn_mask = attn_mask.astype(jnp.float32)

    xes2 = xes.reshape(B, twoE)              # drop the singleton dim (free)
    enc_dtype = enc_out.dtype
    isz = jnp.dtype(enc_dtype).itemsize

    # ---- generation-aware VMEM budget ---------------------------------------
    try:
        phys_vmem = int(pltpu.get_tpu_info().vmem_capacity_bytes)
    except Exception:
        phys_vmem = 64 << 20                 # conservative: smallest (v7x) per-core VMEM
    if vmem_limit_bytes is None:
        # Raise the scoped limit explicitly (defaults are only 16/32 MiB) and
        # leave ~25% headroom below physical VMEM.
        vmem_limit_bytes = max(32 << 20, min(int(phys_vmem * 3 // 4), 100 << 20))
    n_enc_buf = max(2, int(enc_buffers))
    w_bytes = (w_attn.size * w_attn.dtype.itemsize
               + w_combine.size * w_combine.dtype.itemsize)
    usable = int(min(int(vmem_limit_bytes), phys_vmem) * 0.85) - 2 * w_bytes - (2 << 20)
    usable = max(1 << 20, usable)

    # ---- batch block ---------------------------------------------------------
    if block_b is None:
        if B < 16:
            bb = B
        else:
            # >= 2 batch blocks so the 'parallel' batch axis can shard across
            # both TensorCores on v7x; total streamed bytes are unchanged.
            bb = min(128, (((B + 1) // 2 + 7) // 8) * 8)
    else:
        bb = min(B, int(block_b))
        if bb < B and bb % 8:
            bb = max(8, (bb // 8) * 8)       # sublane-aligned partial-batch blocks

    # ---- T tile --------------------------------------------------------------
    if block_t is None:
        budget = max(1 << 20, min(12 << 20, usable // n_enc_buf))
        # Joint bb/tt shrink: never let the 128-lane floor on tt blow the tile
        # past the budget (large HD) — shrink bb (sublane-aligned) first.
        while bb > 8 and bb * 128 * HD * isz > budget:
            bb = max(8, (bb // 2 // 8) * 8)
        per_t = bb * HD * isz
        tt_fit = max(1, budget // per_t)
        if tt_fit >= T:
            tt = T
        else:
            tt = min(T, max(128, (tt_fit // 128) * 128))   # lane-dense T tiles
    else:
        tt = min(T, int(block_t))
        if tt < T:
            tt = min(T, max(128, (tt // 128) * 128))

    nb = pl.cdiv(B, bb)
    nkv = pl.cdiv(T, tt)
    ragged_t = (T % tt) != 0

    # ---- scalar-prefetch tables: skip fully-masked kv tiles -------------------
    # needed[i, k]  : does tile (i, k) contain any attended position?
    # kv_blk[i, k]  : block index actually fetched at grid step (i, k); skipped
    #                 tiles reuse the previous block so their DMA is elided.
    mask_bool = attn_mask != 0
    mask_pad = jnp.pad(mask_bool, ((0, nb * bb - B), (0, nkv * tt - T)))
    needed2 = jnp.any(mask_pad.reshape(nb, bb, nkv, tt), axis=(1, 3))
    needed2 = needed2.at[:, 0].set(True)               # never skip the first kv tile
    kv_ids = jnp.arange(nkv, dtype=jnp.int32)[None, :]
    kv_blk2 = lax.cummax(jnp.where(needed2, kv_ids, 0), axis=1)
    needed_flat = needed2.astype(jnp.int32).reshape(-1)   # (nb * nkv,)
    kv_blk_flat = kv_blk2.astype(jnp.int32).reshape(-1)   # (nb * nkv,)

    # ---- kernel ---------------------------------------------------------------
    def kernel(kvb_ref, nd_ref, xes_ref, lh_ref, enc_ref, mask_ref, wa_ref, wc_ref,
               out_ref, hid_sc, m_sc, l_sc, acc_sc):
        i = pl.program_id(0)
        kv = pl.program_id(1)

        @pl.when(kv == 0)
        def _init():
            m_sc[...] = jnp.full(m_sc.shape, -jnp.inf, dtype=jnp.float32)
            l_sc[...] = jnp.zeros(l_sc.shape, dtype=jnp.float32)
            acc_sc[...] = jnp.zeros(acc_sc.shape, dtype=jnp.float32)
            wa = wa_ref[...]                           # (HD, H), stored (out, in)
            lh = lh_ref[0].astype(wa.dtype)            # (bb, H) last hidden layer
            # hid = last_hidden @ W_attn.T  (contract H with W_attn dim 1)
            hid = lax.dot_general(lh, wa, (((1,), (1,)), ((), ())),
                                  preferred_element_type=jnp.float32)
            hid_sc[...] = hid.astype(hid_sc.dtype)     # cast to enc dtype ONCE

        needed = nd_ref[i * nkv + kv] != 0

        def update(guard_tail):
            enc = enc_ref[...]                         # (bb, tt, HD), f32 or bf16
            hid = hid_sc[...]                          # (bb, HD), already enc dtype
            # scores = hid . enc per batch row (MXU, f32 accumulation)
            s = jnp.einsum('bqd,btd->bqt', hid[:, None, :], enc,
                           preferred_element_type=jnp.float32)[:, 0, :]   # (bb, tt)
            # user mask (nonzero keep / 0 drop); math stays f32
            s = jnp.where(mask_ref[...] != 0, s, jnp.float32(-1e30))
            if guard_tail:
                # boundary tile only: guard the grid-padding region so stale
                # non-finite values never reach the accumulator.
                col = (nkv - 1) * tt + lax.broadcasted_iota(jnp.int32, (bb, tt), 1)
                in_b = col < T
                s = jnp.where(in_b, s, -jnp.inf)
                enc = jnp.where(in_b[:, :, None], enc, jnp.zeros((), enc.dtype))
            # online softmax update
            m_prev = m_sc[...]                                            # (bb, 1)
            m_new = jnp.maximum(m_prev, jnp.max(s, axis=1, keepdims=True))
            alpha = jnp.exp(m_prev - m_new)
            p = jnp.exp(s - m_new)                                        # (bb, tt)
            l_sc[...] = alpha * l_sc[...] + jnp.sum(p, axis=1, keepdims=True)
            pv = jnp.einsum('bqt,btd->bqd', p[:, None, :].astype(enc.dtype), enc,
                            preferred_element_type=jnp.float32)[:, 0, :]  # (bb, HD)
            acc_sc[...] = alpha * acc_sc[...] + pv
            m_sc[...] = m_new

        if ragged_t:
            @pl.when(jnp.logical_and(needed, kv < nkv - 1))
            def _update_body():
                update(False)                    # fast path: no 3D select

            @pl.when(jnp.logical_and(needed, kv == nkv - 1))
            def _update_tail():
                update(True)                     # boundary tile: guarded
        else:
            @pl.when(needed)
            def _update_all():
                update(False)

        @pl.when(kv == nkv - 1)
        def _finalize():
            attn_applied = acc_sc[...] / l_sc[...]     # exact normalization
            wc = wc_ref[...]                           # (E, 2E+HD)
            merged = jnp.concatenate(
                [xes_ref[...].astype(jnp.float32), attn_applied],
                axis=1).astype(wc.dtype)               # (bb, 2E+HD)
            # attn_combine: merged @ W_combine.T (contract dim 1 with dim 1)
            pre = lax.dot_general(merged, wc, (((1,), (1,)), ((), ())),
                                  preferred_element_type=jnp.float32)     # (bb, E)
            out_ref[...] = jnp.tanh(pre).astype(out_ref.dtype)

    # ---- specs / pallas_call ---------------------------------------------------
    def enc_idx(i, k, kvb, nd):
        return (i, kvb[i * nkv + k], 0)

    def mask_idx(i, k, kvb, nd):
        return (i, kvb[i * nkv + k])

    enc_kwargs = {}
    if n_enc_buf > 2:        # optional deeper pipelining on the dominant stream
        enc_kwargs["pipeline_mode"] = pl.Buffered(n_enc_buf)

    in_specs = [
        pl.BlockSpec((bb, twoE), lambda i, k, kvb, nd: (i, 0)),          # xes (2D)
        pl.BlockSpec((1, bb, H), lambda i, k, kvb, nd: (L - 1, i, 0)),   # last hidden
        pl.BlockSpec((bb, tt, HD), enc_idx, **enc_kwargs),               # enc_out tile
        pl.BlockSpec((bb, tt), mask_idx, **enc_kwargs),                  # attn_mask tile
        pl.BlockSpec((HD, H), lambda i, k, kvb, nd: (0, 0)),             # W_attn
        pl.BlockSpec((E, twoE + HD), lambda i, k, kvb, nd: (0, 0)),      # W_combine
    ]
    out_specs = pl.BlockSpec((bb, E), lambda i, k, kvb, nd: (i, 0))
    scratch_shapes = [
        pltpu.VMEM((bb, HD), enc_dtype),     # hid (projected last hidden, enc dtype)
        pltpu.VMEM((bb, 1), jnp.float32),    # running max
        pltpu.VMEM((bb, 1), jnp.float32),    # running denominator
        pltpu.VMEM((bb, HD), jnp.float32),   # weighted-sum accumulator
    ]

    out2 = pl.pallas_call(
        kernel,
        out_shape=jax.ShapeDtypeStruct((B, E), xes.dtype),
        grid_spec=pltpu.PrefetchScalarGridSpec(
            num_scalar_prefetch=2,
            grid=(nb, nkv),
            in_specs=in_specs,
            out_specs=out_specs,
            scratch_shapes=scratch_shapes),
        compiler_params=pltpu.CompilerParams(
            dimension_semantics=("parallel", "arbitrary"),
            vmem_limit_bytes=int(vmem_limit_bytes)),
    )(kv_blk_flat, needed_flat, xes2, hidden, enc_out, attn_mask, w_attn, w_combine)

    return out2.reshape(B, 1, E)


def _reference_forward(xes, hidden, enc_out, attn_mask, w_attn, w_combine):
    """Pure-JAX mirror of the PyTorch forward, for verification (f32 math)."""
    hp = jax.lax.Precision.HIGHEST
    last_hidden = hidden[-1]                                       # (B, H)
    hid = jnp.dot(last_hidden, w_attn.T, precision=hp)             # (B, HD)
    scores = jnp.einsum('bd,btd->bt', hid, enc_out.astype(jnp.float32),
                        precision=hp)                              # (B, T)
    scores = scores - (1.0 - attn_mask) * 1e20
    attn_w = jax.nn.softmax(scores, axis=1)
    attn_applied = jnp.einsum('bt,btd->bd', attn_w, enc_out.astype(jnp.float32),
                              precision=hp)                        # (B, HD)
    merged = jnp.concatenate([xes[:, 0, :], attn_applied], axis=1)
    return jnp.tanh(jnp.dot(merged, w_combine.T, precision=hp))[:, None, :]


if __name__ == "__main__":
    keys = jax.random.split(jax.random.PRNGKey(0), 10)

    # ---- config 1: tiny shapes consistent with the module --------------------
    #   attn_type='general', hidden_size=32, emb_size=16, bidirectional=False,
    #   attn_time='pre', num_layers=2, batch=2, seq=8.
    B, T = 2, 8
    hsz, emb = 32, 16
    HD = hsz
    twoE = 2 * emb
    L = 2

    xes = jax.random.normal(keys[0], (B, 1, twoE), dtype=jnp.float32)
    hidden = jax.random.normal(keys[1], (L, B, hsz), dtype=jnp.float32)
    enc_out = jax.random.normal(keys[2], (B, T, HD), dtype=jnp.float32)
    attn_mask = jnp.ones((B, T), dtype=jnp.float32).at[0, -2:].set(0.0)
    w_attn = 0.1 * jax.random.normal(keys[3], (HD, hsz), dtype=jnp.float32)
    w_combine = 0.1 * jax.random.normal(keys[4], (emb, twoE + HD), dtype=jnp.float32)

    out = attention_layer_general(xes, hidden, enc_out, attn_mask, w_attn, w_combine)
    out = jax.block_until_ready(out)
    ref = _reference_forward(xes, hidden, enc_out, attn_mask, w_attn, w_combine)
    assert out.shape == (B, 1, emb), out.shape
    assert jnp.allclose(out, ref, rtol=2e-2, atol=2e-2), (
        f"f32 max abs err {jnp.max(jnp.abs(out - ref))}")

    # bf16 enc_out path: halves the dominant HBM stream (loose tolerance)
    out_bf16 = attention_layer_general(
        xes, hidden, enc_out.astype(jnp.bfloat16), attn_mask, w_attn, w_combine)
    out_bf16 = jax.block_until_ready(out_bf16)
    assert out_bf16.shape == (B, 1, emb)
    assert bool(jnp.all(jnp.isfinite(out_bf16)))
    assert jnp.allclose(out_bf16, ref, rtol=0.15, atol=0.15), (
        f"bf16 max abs err {jnp.max(jnp.abs(out_bf16 - ref))}")

    # ---- config 2: exercises T tiling, tile skipping and the ragged tail -----
    B2, T2 = 4, 300
    hsz2, emb2 = 128, 16
    HD2 = hsz2
    twoE2 = 2 * emb2
    L2 = 1

    xes_2 = jax.random.normal(keys[5], (B2, 1, twoE2), dtype=jnp.float32)
    hidden_2 = jax.random.normal(keys[6], (L2, B2, hsz2), dtype=jnp.float32)
    enc_2 = jax.random.normal(keys[7], (B2, T2, HD2), dtype=jnp.float32)
    # Middle 128-wide tile fully masked (exercises DMA/compute skipping);
    # tail tile only partially valid (exercises the ragged-boundary guard).
    cols = jnp.arange(T2)
    mask_2 = ((cols < 128) | ((cols >= 256) & (cols < 260))).astype(jnp.float32)
    mask_2 = jnp.broadcast_to(mask_2, (B2, T2))
    w_attn_2 = 0.02 * jax.random.normal(keys[8], (HD2, hsz2), dtype=jnp.float32)
    w_comb_2 = 0.1 * jax.random.normal(keys[9], (emb2, twoE2 + HD2), dtype=jnp.float32)

    out_2 = attention_layer_general(xes_2, hidden_2, enc_2, mask_2, w_attn_2, w_comb_2,
                                    block_t=128)
    out_2 = jax.block_until_ready(out_2)
    ref_2 = _reference_forward(xes_2, hidden_2, enc_2, mask_2, w_attn_2, w_comb_2)
    assert out_2.shape == (B2, 1, emb2), out_2.shape
    assert jnp.allclose(out_2, ref_2, rtol=2e-2, atol=2e-2), (
        f"tiled/skip max abs err {jnp.max(jnp.abs(out_2 - ref_2))}")

    print("KERNEL_OK")
</pallas_src>

<mosaic_0001>
module attributes {stable_mosaic.version = 11 : i64} {
  func.func @kernel(%arg0: i32, %arg1: i32, %arg2: memref<1xi32, #tpu.memory_space<smem>>, %arg3: memref<1xi32, #tpu.memory_space<smem>>, %arg4: memref<2x32xf32, #tpu.memory_space<vmem>>, %arg5: memref<1x2x32xf32, #tpu.memory_space<vmem>>, %arg6: memref<2x8x32xf32, #tpu.memory_space<vmem>>, %arg7: memref<2x8xf32, #tpu.memory_space<vmem>>, %arg8: memref<32x32xf32, #tpu.memory_space<vmem>>, %arg9: memref<16x64xf32, #tpu.memory_space<vmem>>, %arg10: memref<2x16xf32, #tpu.memory_space<vmem>>, %arg11: memref<2x32xf32, #tpu.memory_space<vmem>>, %arg12: memref<2x1xf32, #tpu.memory_space<vmem>>, %arg13: memref<2x1xf32, #tpu.memory_space<vmem>>, %arg14: memref<2x32xf32, #tpu.memory_space<vmem>>) attributes {dimension_semantics = [#tpu.dimension_semantics<parallel>, #tpu.dimension_semantics<arbitrary>], iteration_bounds = array<i64: 1, 1>, scalar_prefetch = 2 : i64, scratch_operands = 4 : i64, tpu.core_type = #tpu.core_type<tc>, window_params = [{transform_indices = @transform_0, window_bounds = array<i64: 2, 32>}, {transform_indices = @transform_1, window_bounds = array<i64: 1, 2, 32>}, {transform_indices = @transform_2, window_bounds = array<i64: 2, 8, 32>}, {transform_indices = @transform_3, window_bounds = array<i64: 2, 8>}, {pipeline_mode = #tpu.pipeline_mode<synchronous>, transform_indices = @transform_4, window_bounds = array<i64: 32, 32>}, {pipeline_mode = #tpu.pipeline_mode<synchronous>, transform_indices = @transform_5, window_bounds = array<i64: 16, 64>}, {transform_indices = @transform_6, window_bounds = array<i64: 2, 16>}]} {
    %c0_i32 = arith.constant 0 : i32
    %0 = arith.cmpi eq, %arg1, %c0_i32 : i32
    %1 = arith.extui %0 : i1 to i32
    %c0_i32_0 = arith.constant 0 : i32
    %2 = arith.cmpi ne, %1, %c0_i32_0 : i32
    scf.if %2 {
      %cst = arith.constant 0xFF800000 : f32
      %13 = vector.broadcast %cst : f32 to vector<2x1xf32>
      %c0 = arith.constant 0 : index
      %c0_5 = arith.constant 0 : index
      %14 = vector.load %arg12[%c0, %c0_5] : memref<2x1xf32, #tpu.memory_space<vmem>>, vector<2x1xf32>
      tpu.vector_store %arg12[%c0, %c0_5], %13 {strides = array<i32>} : memref<2x1xf32, #tpu.memory_space<vmem>>, vector<2x1xf32>,
      %cst_6 = arith.constant 0.000000e+00 : f32
      %15 = vector.broadcast %cst_6 : f32 to vector<2x1xf32>
      %c0_7 = arith.constant 0 : index
      %c0_8 = arith.constant 0 : index
      %16 = vector.load %arg13[%c0_7, %c0_8] : memref<2x1xf32, #tpu.memory_space<vmem>>, vector<2x1xf32>
      tpu.vector_store %arg13[%c0_7, %c0_8], %15 {strides = array<i32>} : memref<2x1xf32, #tpu.memory_space<vmem>>, vector<2x1xf32>,
      %cst_9 = arith.constant 0.000000e+00 : f32
      %17 = vector.broadcast %cst_9 : f32 to vector<2x32xf32>
      %c0_10 = arith.constant 0 : index
      %c0_11 = arith.constant 0 : index
      %18 = vector.load %arg14[%c0_10, %c0_11] : memref<2x32xf32, #tpu.memory_space<vmem>>, vector<2x32xf32>
      tpu.vector_store %arg14[%c0_10, %c0_11], %17 {strides = array<i32>} : memref<2x32xf32, #tpu.memory_space<vmem>>, vector<2x32xf32>,
      %c0_12 = arith.constant 0 : index
      %c0_13 = arith.constant 0 : index
      %19 = vector.load %arg8[%c0_12, %c0_13] : memref<32x32xf32, #tpu.memory_space<vmem>>, vector<32x32xf32>
      %c0_14 = arith.constant 0 : index
      %c0_15 = arith.constant 0 : index
      %c0_16 = arith.constant 0 : index
      %20 = vector.load %arg5[%c0_14, %c0_15, %c0_16] : memref<1x2x32xf32, #tpu.memory_space<vmem>>, vector<1x2x32xf32>
      %21 = vector.shape_cast %20 : vector<1x2x32xf32> to vector<2x32xf32>
      %cst_17 = arith.constant dense<0.000000e+00> : vector<2x32xf32>
      %22 = tpu.matmul %21, %19, %cst_17 {dimension_numbers = #tpu.dot_dimension_numbers<[1], [1], [0], [0], [0, 0, 1, 0], [], []>} : vector<2x32xf32>, vector<32x32xf32>, vector<2x32xf32> -> vector<2x32xf32>
      %c0_18 = arith.constant 0 : index
      %c0_19 = arith.constant 0 : index
      %23 = vector.load %arg11[%c0_18, %c0_19] : memref<2x32xf32, #tpu.memory_space<vmem>>, vector<2x32xf32>
      tpu.vector_store %arg11[%c0_18, %c0_19], %22 {strides = array<i32>} : memref<2x32xf32, #tpu.memory_space<vmem>>, vector<2x32xf32>,
    } else {
    }
    %c1_i32 = arith.constant 1 : i32
    %3 = arith.muli %arg0, %c1_i32 : i32
    %4 = arith.addi %3, %arg1 : i32
    %5 = arith.index_cast %4 : i32 to index
    %6 = memref.load %arg3[%5] : memref<1xi32, #tpu.memory_space<smem>>
    %c0_i32_1 = arith.constant 0 : i32
    %7 = arith.cmpi ne, %6, %c0_i32_1 : i32
    %8 = arith.extui %7 : i1 to i32
    %c0_i32_2 = arith.constant 0 : i32
    %9 = arith.cmpi ne, %8, %c0_i32_2 : i32
    scf.if %9 {
      %c0 = arith.constant 0 : index
      %c0_5 = arith.constant 0 : index
      %c0_6 = arith.constant 0 : index
      %13 = vector.load %arg6[%c0, %c0_5, %c0_6] : memref<2x8x32xf32, #tpu.memory_space<vmem>>, vector<2x8x32xf32>
      %c0_7 = arith.constant 0 : index
      %c0_8 = arith.constant 0 : index
      %14 = vector.load %arg11[%c0_7, %c0_8] : memref<2x32xf32, #tpu.memory_space<vmem>>, vector<2x32xf32>
      %15 = vector.shape_cast %14 : vector<2x32xf32> to vector<2x1x32xf32>
      "tpu.trace_start"() <{level = 10 : i32, message = "bqd,btd->bqt"}> : () -> ()
      %cst = arith.constant dense<0.000000e+00> : vector<2x1x8xf32>
      %16 = tpu.matmul %15, %13, %cst {dimension_numbers = #tpu.dot_dimension_numbers<[2], [2], [1], [1], [0, 0, 0, 1, 1, 1], [0], [0]>} : vector<2x1x32xf32>, vector<2x8x32xf32>, vector<2x1x8xf32> -> vector<2x1x8xf32>
      "tpu.trace_stop"() : () -> ()
      %17 = vector.shape_cast %16 : vector<2x1x8xf32> to vector<2x8xf32>
      %c0_9 = arith.constant 0 : index
      %c0_10 = arith.constant 0 : index
      %18 = vector.load %arg7[%c0_9, %c0_10] : memref<2x8xf32, #tpu.memory_space<vmem>>, vector<2x8xf32>
      %cst_11 = arith.constant 0.000000e+00 : f32
      %19 = vector.broadcast %cst_11 : f32 to vector<2x8xf32>
      %20 = arith.cmpf one, %18, %19 : vector<2x8xf32>
      %cst_12 = arith.constant -1.000000e+30 : f32
      %21 = vector.broadcast %cst_12 : f32 to vector<2x8xf32>
      %22 = arith.select %20, %17, %21 : vector<2x8xi1>, vector<2x8xf32>
      %c0_13 = arith.constant 0 : index
      %c0_14 = arith.constant 0 : index
      %23 = vector.load %arg12[%c0_13, %c0_14] : memref<2x1xf32, #tpu.memory_space<vmem>>, vector<2x1xf32>
      %cst_15 = arith.constant dense<0xFF800000> : vector<2xf32>
      %24 = vector.multi_reduction <maximumf>, %22, %cst_15 [1] : vector<2x8xf32> to vector<2xf32>
      %25 = vector.shape_cast %24 : vector<2xf32> to vector<2x1xf32>
      %26 = arith.maximumf %23, %25 : vector<2x1xf32>
      %27 = arith.subf %23, %26 : vector<2x1xf32>
      %28 = math.exp %27 : vector<2x1xf32>
      %29 = vector.broadcast %26 : vector<2x1xf32> to vector<2x8xf32>
      %30 = arith.subf %22, %29 : vector<2x8xf32>
      %31 = math.exp %30 : vector<2x8xf32>
      %c0_16 = arith.constant 0 : index
      %c0_17 = arith.constant 0 : index
      %32 = vector.load %arg13[%c0_16, %c0_17] : memref<2x1xf32, #tpu.memory_space<vmem>>, vector<2x1xf32>
      %33 = arith.mulf %28, %32 : vector<2x1xf32>
      %cst_18 = arith.constant dense<0.000000e+00> : vector<2xf32>
      %34 = vector.multi_reduction <add>, %31, %cst_18 [1] : vector<2x8xf32> to vector<2xf32>
      %35 = vector.shape_cast %34 : vector<2xf32> to vector<2x1xf32>
      %36 = arith.addf %33, %35 : vector<2x1xf32>
      %c0_19 = arith.constant 0 : index
      %c0_20 = arith.constant 0 : index
      %37 = vector.load %arg13[%c0_19, %c0_20] : memref<2x1xf32, #tpu.memory_space<vmem>>, vector<2x1xf32>
      tpu.vector_store %arg13[%c0_19, %c0_20], %36 {strides = array<i32>} : memref<2x1xf32, #tpu.memory_space<vmem>>, vector<2x1xf32>,
      %38 = vector.shape_cast %31 : vector<2x8xf32> to vector<2x1x8xf32>
      "tpu.trace_start"() <{level = 10 : i32, message = "bqt,btd->bqd"}> : () -> ()
      %cst_21 = arith.constant dense<0.000000e+00> : vector<2x1x32xf32>
      %39 = tpu.matmul %38, %13, %cst_21 {dimension_numbers = #tpu.dot_dimension_numbers<[2], [1], [1], [2], [0, 0, 0, 1, 1, 2], [0], [0]>} : vector<2x1x8xf32>, vector<2x8x32xf32>, vector<2x1x32xf32> -> vector<2x1x32xf32>
      "tpu.trace_stop"() : () -> ()
      %40 = vector.shape_cast %39 : vector<2x1x32xf32> to vector<2x32xf32>
      %c0_22 = arith.constant 0 : index
      %c0_23 = arith.constant 0 : index
      %41 = vector.load %arg14[%c0_22, %c0_23] : memref<2x32xf32, #tpu.memory_space<vmem>>, vector<2x32xf32>
      %42 = vector.broadcast %28 : vector<2x1xf32> to vector<2x32xf32>
      %43 = arith.mulf %42, %41 : vector<2x32xf32>
      %44 = arith.addf %43, %40 : vector<2x32xf32>
      %c0_24 = arith.constant 0 : index
      %c0_25 = arith.constant 0 : index
      %45 = vector.load %arg14[%c0_24, %c0_25] : memref<2x32xf32, #tpu.memory_space<vmem>>, vector<2x32xf32>
      tpu.vector_store %arg14[%c0_24, %c0_25], %44 {strides = array<i32>} : memref<2x32xf32, #tpu.memory_space<vmem>>, vector<2x32xf32>,
      %c0_26 = arith.constant 0 : index
      %c0_27 = arith.constant 0 : index
      %46 = vector.load %arg12[%c0_26, %c0_27] : memref<2x1xf32, #tpu.memory_space<vmem>>, vector<2x1xf32>
      tpu.vector_store %arg12[%c0_26, %c0_27], %26 {strides = array<i32>} : memref<2x1xf32, #tpu.memory_space<vmem>>, vector<2x1xf32>,
    } else {
    }
    %c0_i32_3 = arith.constant 0 : i32
    %10 = arith.cmpi eq, %arg1, %c0_i32_3 : i32
    %11 = arith.extui %10 : i1 to i32
    %c0_i32_4 = arith.constant 0 : i32
    %12 = arith.cmpi ne, %11, %c0_i32_4 : i32
    scf.if %12 {
      %c0 = arith.constant 0 : index
      %c0_5 = arith.constant 0 : index
      %13 = vector.load %arg14[%c0, %c0_5] : memref<2x32xf32, #tpu.memory_space<vmem>>, vector<2x32xf32>
      %c0_6 = arith.constant 0 : index
      %c0_7 = arith.constant 0 : index
      %14 = vector.load %arg13[%c0_6, %c0_7] : memref<2x1xf32, #tpu.memory_space<vmem>>, vector<2x1xf32>
      %15 = vector.broadcast %14 : vector<2x1xf32> to vector<2x32xf32>
      %16 = arith.divf %13, %15 : vector<2x32xf32>
      %c0_8 = arith.constant 0 : index
      %c0_9 = arith.constant 0 : index
      %17 = vector.load %arg9[%c0_8, %c0_9] : memref<16x64xf32, #tpu.memory_space<vmem>>, vector<16x64xf32>
      %c0_10 = arith.constant 0 : index
      %c0_11 = arith.constant 0 : index
      %18 = vector.load %arg4[%c0_10, %c0_11] : memref<2x32xf32, #tpu.memory_space<vmem>>, vector<2x32xf32>
      %19 = tpu.concatenate %18, %16 in 1 : vector<2x32xf32>, vector<2x32xf32> -> vector<2x64xf32>
      %cst = arith.constant dense<0.000000e+00> : vector<2x16xf32>
      %20 = tpu.matmul %19, %17, %cst {dimension_numbers = #tpu.dot_dimension_numbers<[1], [1], [0], [0], [0, 0, 1, 0], [], []>} : vector<2x64xf32>, vector<16x64xf32>, vector<2x16xf32> -> vector<2x16xf32>
      %21 = math.tanh %20 : vector<2x16xf32>
      %c0_12 = arith.constant 0 : index
      %c0_13 = arith.constant 0 : index
      %22 = vector.load %arg10[%c0_12, %c0_13] : memref<2x16xf32, #tpu.memory_space<vmem>>, vector<2x16xf32>
      tpu.vector_store %arg10[%c0_12, %c0_13], %21 {strides = array<i32>} : memref<2x16xf32, #tpu.memory_space<vmem>>, vector<2x16xf32>,
    } else {
    }
    return
  }
  func.func @transform_0(%arg0: i32, %arg1: i32, %arg2: memref<1xi32, #tpu.memory_space<smem>>, %arg3: memref<1xi32, #tpu.memory_space<smem>>) -> (i32, i32) {
    %c0_i32 = arith.constant 0 : i32
    %c0_i32_0 = arith.constant 0 : i32
    return %arg0, %c0_i32 : i32, i32
  }
  func.func @transform_1(%arg0: i32, %arg1: i32, %arg2: memref<1xi32, #tpu.memory_space<smem>>, %arg3: memref<1xi32, #tpu.memory_space<smem>>) -> (i32, i32, i32) {
    %c1_i32 = arith.constant 1 : i32
    %c0_i32 = arith.constant 0 : i32
    %c0_i32_0 = arith.constant 0 : i32
    return %c1_i32, %arg0, %c0_i32 : i32, i32, i32
  }
  func.func @transform_2(%arg0: i32, %arg1: i32, %arg2: memref<1xi32, #tpu.memory_space<smem>>, %arg3: memref<1xi32, #tpu.memory_space<smem>>) -> (i32, i32, i32) {
    %c1_i32 = arith.constant 1 : i32
    %0 = arith.muli %arg0, %c1_i32 : i32
    %1 = arith.addi %0, %arg1 : i32
    %2 = arith.index_cast %1 : i32 to index
    %3 = memref.load %arg2[%2] : memref<1xi32, #tpu.memory_space<smem>>
    %c0_i32 = arith.constant 0 : i32
    %c0_i32_0 = arith.constant 0 : i32
    return %arg0, %3, %c0_i32 : i32, i32, i32
  }
  func.func @transform_3(%arg0: i32, %arg1: i32, %arg2: memref<1xi32, #tpu.memory_space<smem>>, %arg3: memref<1xi32, #tpu.memory_space<smem>>) -> (i32, i32) {
    %c1_i32 = arith.constant 1 : i32
    %0 = arith.muli %arg0, %c1_i32 : i32
    %1 = arith.addi %0, %arg1 : i32
    %2 = arith.index_cast %1 : i32 to index
    %3 = memref.load %arg2[%2] : memref<1xi32, #tpu.memory_space<smem>>
    %c0_i32 = arith.constant 0 : i32
    return %arg0, %3 : i32, i32
  }
  func.func @transform_4(%arg0: i32, %arg1: i32, %arg2: memref<1xi32, #tpu.memory_space<smem>>, %arg3: memref<1xi32, #tpu.memory_space<smem>>) -> (i32, i32) {
    %c0_i32 = arith.constant 0 : i32
    %c0_i32_0 = arith.constant 0 : i32
    %c0_i32_1 = arith.constant 0 : i32
    return %c0_i32, %c0_i32_0 : i32, i32
  }
  func.func @transform_5(%arg0: i32, %arg1: i32, %arg2: memref<1xi32, #tpu.memory_space<smem>>, %arg3: memref<1xi32, #tpu.memory_space<smem>>) -> (i32, i32) {
    %c0_i32 = arith.constant 0 : i32
    %c0_i32_0 = arith.constant 0 : i32
    %c0_i32_1 = arith.constant 0 : i32
    return %c0_i32, %c0_i32_0 : i32, i32
  }
  func.func @transform_6(%arg0: i32, %arg1: i32, %arg2: memref<1xi32, #tpu.memory_space<smem>>, %arg3: memref<1xi32, #tpu.memory_space<smem>>) -> (i32, i32) {
    %c0_i32 = arith.constant 0 : i32
    %c0_i32_0 = arith.constant 0 : i32
    return %arg0, %c0_i32 : i32, i32
  }
}

</mosaic_0001>

<llo_original>
// kernel: tpu_custom_call.1
$region0: #{tpu_custom_call.1}
  #allocation0 [shape = 'u32[]', space=smem, size = 0x4, offset = 0x4, fixed_abs, tag = 'smem constant byte address 0x4 - core index']
  #allocation1 [shape = 'u32[144,128]{1,0:T(1,128)}', space=vmem, size = 0x12000, scoped, tag = 'internal scratch']
  #allocation2 [shape = 'f32[2,32]{1,0:T(2,128)}', space=vmem, size = 0x400, scoped, tag = 'scratch operand']
  #allocation3 [shape = 'f32[2,1]{1,0:T(2,128)}', space=vmem, size = 0x400, scoped, tag = 'scratch operand']
  #allocation4 [shape = 'f32[2,1]{1,0:T(2,128)}', space=vmem, size = 0x400, scoped, tag = 'scratch operand']
  #allocation5 [shape = 'f32[2,32]{1,0:T(2,128)}', space=vmem, size = 0x400, scoped, tag = 'scratch operand']
  #allocation6 [shape = 's32[1]{0}', space=sflag, size = 0x4, scoped, tag = 'scoped memory for tpu_custom_call.1']
  #allocation7 [shape = 's32[1]{0:T(128)S(6)}', space=smem, size = 0x200, scoped, tag = 'prefetched SMEM operand 0']
  #allocation8 [shape = 's32[1]{0:T(128)S(6)}', space=smem, size = 0x200, scoped, tag = 'prefetched SMEM operand 1']
  %s0 = inlined_call_operand.<no memory space> [shape: s32[1], index: 0, kind: input, shape index: {}]
  %s1 = inlined_call_operand.<no memory space> [shape: s32[1], index: 1, kind: input, shape index: {}]
  %s2 = inlined_call_operand.hbm [shape: f32[2,32], index: 2, kind: input, shape index: {}]
  %s3 = inlined_call_operand.vmem [shape: f32[2,2,32], index: 3, kind: input, shape index: {}]
  %s4 = inlined_call_operand.hbm [shape: f32[2,8,32], index: 4, kind: input, shape index: {}]
  %s5 = inlined_call_operand.vmem [shape: f32[2,8], index: 5, kind: input, shape index: {}]
  %s6 = inlined_call_operand.hbm [shape: f32[32,32], index: 6, kind: input, shape index: {}]
  %s7 = inlined_call_operand.hbm [shape: f32[16,64], index: 7, kind: input, shape index: {}]
  %s8 = inlined_call_operand.hbm [shape: f32[2,16], index: 8, kind: output, shape index: {}]
  %s9 = sld [smem:[#allocation0]]
  $region62: #{tpu_custom_call.1} parent=0
    _
  %s11 = ssub.s32 1, %s9
  %s12 = scalar_select 0, %s11, %s9
  %13 = sst [smem:[#allocation7]] %s0
  %14 = sst [smem:[#allocation8]] %s1
  $region1: #{tpu_custom_call.1} parent=0
    #allocation9 [shape = 'u8[1024]{0}', space=vmem, size = 0x400, scoped, tag = 'input window, operand 2, single buffered']
    #allocation10 [shape = 's32[1]{0}', space=sflag, size = 0x4, scoped, tag = 'scoped memory for tpu_custom_call.1']
    #allocation11 [shape = 's32[1]{0}', space=sflag, size = 0x4, scoped, tag = 'scoped memory for tpu_custom_call.1']
    #allocation12 [shape = 'u8[8192]{0}', space=vmem, size = 0x2000, scoped, tag = 'input window, operand 4, single buffered']
    #allocation13 [shape = 's32[1]{0}', space=sflag, size = 0x4, scoped, tag = 'scoped memory for tpu_custom_call.1']
    #allocation14 [shape = 'u8[16384]{0}', space=vmem, size = 0x4000, scoped, tag = 'input window, operand 6, single buffered']
    #allocation15 [shape = 'u8[8192]{0}', space=vmem, size = 0x2000, scoped, tag = 'input window, operand 7, single buffered']
    #allocation16 [shape = 's32[1]{0}', space=sflag, size = 0x4, scoped, tag = 'scoped memory for tpu_custom_call.1']
    #allocation17 [shape = 'u8[1024]{0}', space=vmem, size = 0x400, scoped, tag = 'output window, operand 0, single buffered']
    %15 = vsyncpa [#allocation10], 0
    %16 = vsyncpa [#allocation13], 0
    %17 = vsyncpa [#allocation16], 0
    %18 = vsyncpa [#allocation11], 0
    // Predicated region
    $region2: #{tpu_custom_call.1} parent=1 // pred_check
      _
    $region3: #{tpu_custom_call.1} parent=1 // pred_check_branch
      %20 = sbr.rel (0) target = $region5
    $region4: #{tpu_custom_call.1} parent=1 // pred_region
      %s22 = ssub.s32 32, 32
      %23 = vsyncadd [#allocation10], %s22
      %s25 = sshll.u32 [#allocation9], 4
      %s26 = int_to_ptr.vmem [resolvable:$true] %s25
      %28 = dma.hbm_to_vmem [thread:$0]  %s2, 32, %s26, [#allocation10]
    $region5: #{tpu_custom_call.1} parent=1 // pred_fallthru
      _
    // Predicated region
    $region6: #{tpu_custom_call.1} parent=1 // pred_check
      _
    $region7: #{tpu_custom_call.1} parent=1 // pred_check_branch
      %30 = sbr.rel (0) target = $region9
    $region8: #{tpu_custom_call.1} parent=1 // pred_region
      %s31 = scalar_lea.vmem %s3, 2
    $region9: #{tpu_custom_call.1} parent=1 // pred_fallthru
      _
    // Predicated region
    $region10: #{tpu_custom_call.1} parent=1 // pred_check
      _
    $region11: #{tpu_custom_call.1} parent=1 // pred_check_branch
      %33 = sbr.rel (0) target = $region13
    $region12: #{tpu_custom_call.1} parent=1 // pred_region
      %s34 = sadd.s32 0, 0
      %s35 = sld [smem:[#allocation7 + %s34]]
      %s37 = ssub.s32 256, 256
      %38 = vsyncadd [#allocation13], %s37
      %s39 = smul.addr %s35, 128
      %s40 = scalar_lea.hbm %s4, %s39
      %s41 = sshll.u32 [#allocation12], 4
      %s42 = int_to_ptr.vmem [resolvable:$true] %s41
      %47 = dma.hbm_to_vmem [thread:$0]  %s40, 256, %s42, [#allocation13], 128, 128, 8
    $region13: #{tpu_custom_call.1} parent=1 // pred_fallthru
      _
    // Predicated region
    $region14: #{tpu_custom_call.1} parent=1 // pred_check
      _
    $region15: #{tpu_custom_call.1} parent=1 // pred_check_branch
      %49 = sbr.rel (0) target = $region17
    $region16: #{tpu_custom_call.1} parent=1 // pred_region
      %s50 = sadd.s32 0, 0
      %s51 = sld [smem:[#allocation7 + %s50]]
      %p52 = scmp.lt.s32.totalorder %s51, 0
      %s53 = scalar_select %p52, %s51, 0
      %s54 = smul.addr %s53, 2
      %s55 = scalar_lea.vmem %s5, %s54
      %s56 = sadd.s32 0, 0
      %s57 = sld [smem:[#allocation7 + %s56]]
    $region17: #{tpu_custom_call.1} parent=1 // pred_fallthru
      _
    // Predicated region
    $region18: #{tpu_custom_call.1} parent=1 // pred_check
      _
    $region19: #{tpu_custom_call.1} parent=1 // pred_check_branch
      %59 = sbr.rel (0) target = $region21
    $region20: #{tpu_custom_call.1} parent=1 // pred_region
      %s61 = ssub.s32 512, 512
      %62 = vsyncadd [#allocation13], %s61
      %s63 = sshll.u32 [#allocation14], 4
      %s64 = int_to_ptr.vmem [resolvable:$true] %s63
      %69 = dma.hbm_to_vmem [thread:$0]  %s6, 512, %s64, [#allocation13], 128, 128, 8
    $region21: #{tpu_custom_call.1} parent=1 // pred_fallthru
      _
    // Predicated region
    $region22: #{tpu_custom_call.1} parent=1 // pred_check
      _
    $region23: #{tpu_custom_call.1} parent=1 // pred_check_branch
      %71 = sbr.rel (0) target = $region25
    $region24: #{tpu_custom_call.1} parent=1 // pred_region
      %s73 = ssub.s32 256, 256
      %74 = vsyncadd [#allocation16], %s73
      %s75 = sshll.u32 [#allocation15], 4
      %s76 = int_to_ptr.vmem [resolvable:$true] %s75
      %81 = dma.hbm_to_vmem [thread:$0]  %s7, 256, %s76, [#allocation16], 128, 128, 8
    $region25: #{tpu_custom_call.1} parent=1 // pred_fallthru
      _
    // Predicated region
    $region26: #{tpu_custom_call.1} parent=1 // pred_check
      _
    $region27: #{tpu_custom_call.1} parent=1 // pred_check_branch
      %83 = sbr.rel (0) target = $region29
    $region28: #{tpu_custom_call.1} parent=1 // pred_region
      %84 = dma.done [#allocation10], 32
    $region29: #{tpu_custom_call.1} parent=1 // pred_fallthru
      _
    // Predicated region
    $region30: #{tpu_custom_call.1} parent=1 // pred_check
      _
    $region31: #{tpu_custom_call.1} parent=1 // pred_check_branch
      %86 = sbr.rel (0) target = $region33
    $region32: #{tpu_custom_call.1} parent=1 // pred_region
      %87 = dma.done [#allocation13], 256
    $region33: #{tpu_custom_call.1} parent=1 // pred_fallthru
      _
    // Predicated region
    $region34: #{tpu_custom_call.1} parent=1 // pred_check
      _
    $region35: #{tpu_custom_call.1} parent=1 // pred_check_branch
      %89 = sbr.rel (0) target = $region37
    $region36: #{tpu_custom_call.1} parent=1 // pred_region
      %90 = dma.done [#allocation13], 512
    $region37: #{tpu_custom_call.1} parent=1 // pred_fallthru
      _
    // Predicated region
    $region38: #{tpu_custom_call.1} parent=1 // pred_check
      _
    $region39: #{tpu_custom_call.1} parent=1 // pred_check_branch
      %92 = sbr.rel (0) target = $region41
    $region40: #{tpu_custom_call.1} parent=1 // pred_region
      %93 = dma.done [#allocation16], 256
    $region41: #{tpu_custom_call.1} parent=1 // pred_fallthru
      _
    %s94 = scalar_lea.vmem %s3, 2
    %s95 = sadd.s32 0, 0
    %s96 = sld [smem:[#allocation7 + %s95]]
    %p97 = scmp.lt.s32.totalorder %s96, 0
    %s98 = scalar_select %p97, %s96, 0
    %s99 = smul.addr %s98, 2
    %s100 = scalar_lea.vmem %s5, %s99
    %s101 = scalar_lea.vmem %s3, 2
    %s102 = sadd.s32 0, 0
    %s103 = sld [smem:[#allocation7 + %s102]]
    %s104 = sadd.s32 0, 0
    %s105 = sld [smem:[#allocation7 + %s104]]
    %p106 = scmp.lt.s32.totalorder %s105, 0
    %s107 = scalar_select %p106, %s105, 0
    %s108 = smul.addr %s107, 2
    %s109 = scalar_lea.vmem %s5, %s108
    %s110 = sadd.s32 0, 0
    %s111 = sld [smem:[#allocation7 + %s110]]
    %p112 = scmp.eq.s32.totalorder 0, 0
    // Predicated region
    $region42: #{tpu_custom_call.1} parent=1 // pred_check
      %p113 = pneg %p112
    $region43: #{tpu_custom_call.1} parent=1 // pred_check_branch
      %115 = sbr.rel (%p113) target = $region45
    $region44: #{tpu_custom_call.1} parent=1 // pred_region
      %vm116 = vcmask 1024
      %117 = vst.msk [vmem:[#allocation3] sm:$0x3] %vm116, -inf
      %118 = vst.msk [vmem:[#allocation4] sm:$0x3] %vm116, 0.0
      %vm119 = vcmask 254976
      %120 = vst.msk [vmem:[#allocation5] sm:$0x3] %vm119, 0.0
      %v121 = vld [vmem:[#allocation14] sm:$0xff]
      %v122 = vld [vmem:[#allocation14 + $0x8] sm:$0xff]
      %v123 = vld [vmem:[#allocation14 + $0x10] sm:$0xff]
      %v124 = vld [vmem:[#allocation14 + $0x18] sm:$0xff]
      %v125 = vld [vmem:[%s101] sm:$0x3]
      %vm126 = vcmask 261120
      %v128 = vsel %vm126, %v125, 0
      %v131 = vsel %vm126, %v121, 0
      %v134 = vsel %vm126, %v122, 0
      %v137 = vsel %vm126, %v123, 0
      %v140 = vsel %vm126, %v124, 0
      %142 = vmatprep.subr.mxu0 0.0
      %143 = vmatpush1.xpose.msra.mxu0 0.0
      %144 = vmatprep.subr.mxu0 0.0
      %145 = vmatpush1.xpose.msra.mxu0 0.0
      %146 = vmatprep.subr.mxu0 0.0
      %147 = vmatpush1.xpose.msra.mxu0 0.0
      %148 = vmatprep.subr.mxu0 0.0
      %149 = vmatpush1.xpose.msra.mxu0 0.0
      %150 = vmatprep.subr.mxu0 0.0
      %151 = vmatpush1.xpose.msra.mxu0 0.0
      %152 = vmatprep.subr.mxu0 0.0
      %153 = vmatpush1.xpose.msra.mxu0 0.0
      %154 = vmatprep.subr.mxu0 0.0
      %155 = vmatpush1.xpose.msra.mxu0 0.0
      %156 = vmatprep.subr.mxu0 0.0
      %157 = vmatpush1.xpose.msra.mxu0 0.0
      %158 = vmatprep.subr.mxu0 0.0
      %159 = vmatpush1.xpose.msra.mxu0 0.0
      %160 = vmatprep.subr.mxu0 0.0
      %161 = vmatpush1.xpose.msra.mxu0 0.0
      %162 = vmatprep.subr.mxu0 0.0
      %163 = vmatpush1.xpose.msra.mxu0 0.0
      %164 = vmatprep.subr.mxu0 0.0
      %165 = vmatpush1.xpose.msra.mxu0 0.0
      %166 = vmatprep.subr.mxu0 0.0
      %167 = vmatpush1.xpose.msra.mxu0 %v140
      %168 = vmatprep.subr.mxu0 0.0
      %169 = vmatpush1.xpose.msra.mxu0 %v137
      %170 = vmatprep.subr.mxu0 0.0
      %171 = vmatpush1.xpose.msra.mxu0 %v134
      %172 = vmatprep.subr.mxu0 0.0
      %173 = vmatpush1.xpose.msra.mxu0 %v131
      %174 = vmatprep.subr.mxu0 0.0
      %175 = vmatpush2.xpose.msra.mxu0 0.0
      %176 = vmatprep.subr.mxu0 0.0
      %177 = vmatpush2.xpose.msra.mxu0 0.0
      %178 = vmatprep.subr.mxu0 0.0
      %179 = vmatpush2.xpose.msra.mxu0 0.0
      %180 = vmatprep.subr.mxu0 0.0
      %181 = vmatpush2.xpose.msra.mxu0 0.0
      %182 = vmatprep.subr.mxu0 0.0
      %183 = vmatpush2.xpose.msra.mxu0 0.0
      %184 = vmatprep.subr.mxu0 0.0
      %185 = vmatpush2.xpose.msra.mxu0 0.0
      %186 = vmatprep.subr.mxu0 0.0
      %187 = vmatpush2.xpose.msra.mxu0 0.0
      %188 = vmatprep.subr.mxu0 0.0
      %189 = vmatpush2.xpose.msra.mxu0 0.0
      %190 = vmatprep.subr.mxu0 0.0
      %191 = vmatpush2.xpose.msra.mxu0 0.0
      %192 = vmatprep.subr.mxu0 0.0
      %193 = vmatpush2.xpose.msra.mxu0 0.0
      %194 = vmatprep.subr.mxu0 0.0
      %195 = vmatpush2.xpose.msra.mxu0 0.0
      %196 = vmatprep.subr.mxu0 0.0
      %197 = vmatpush2.xpose.msra.mxu0 0.0
      %198 = vmatprep.subr.mxu0 0.0
      %199 = vmatpush2.xpose.msra.mxu0 0.0
      %200 = vmatprep.subr.mxu0 0.0
      %201 = vmatpush2.xpose.msra.mxu0 0.0
      %202 = vmatprep.subr.mxu0 0.0
      %203 = vmatpush2.xpose.msra.mxu0 0.0
      %204 = vmatprep.subr.mxu0 0.0
      %205 = vmatpush2.xpose.msra.mxu0 0.0
      %206 = vmatprep.mubr.f32.mxu0 0.0
      %207 = vmatmul.mubr.f32.gmra.mxu0 %v128
      %v208 = vpop.f32.mrf.mxu0
      %v209 = vadd.f32 0.0, %v208
      %v210 = vpop.f32.mrf.mxu0
      %211 = vdwg.mxu0
      %212 = vst.msk [vmem:[#allocation2] sm:$0x3] %vm119, %v209
    $region45: #{tpu_custom_call.1} parent=1 // pred_fallthru
      _
    %s213 = sadd.s32 0, 0
    %s214 = sld [smem:[#allocation8 + %s213]]
    %p215 = scmp.ne.s32.totalorder %s214, 0
    // Predicated region
    $region46: #{tpu_custom_call.1} parent=1 // pred_check
      %p216 = pneg %p215
    $region47: #{tpu_custom_call.1} parent=1 // pred_check_branch
      %218 = sbr.rel (%p216) target = $region49
    $region48: #{tpu_custom_call.1} parent=1 // pred_region
      %v219 = vld [vmem:[#allocation12] sm:$0xff]
      %v220 = vld [vmem:[#allocation12 + $0x8] sm:$0xff]
      %v221 = vld [vmem:[#allocation2] sm:$0x3]
      %v224 = vunpack.c.l.s4 1966171168
      %v225 = vunpack.c.0.s8 %v224
      %v226 = vlaneseq
      %v227 = vshrl.u32 %v226, 7
      %v228 = vsub.s32 %v225, %v227
      %v229 = vrot.slane %v221, %v228
      %v230 = vcombine.high %v229, %v229
      %v232 = vunpack.c.l.s4 1966171168
      %v233 = vunpack.c.0.s8 %v232
      %v234 = vlaneseq
      %v235 = vshrl.u32 %v234, 7
      %v236 = vsub.s32 %v233, %v235
      %v237 = vrot.slane %v229, %v236
      %v239 = vunpack.c.l.s4 1966171168
      %v240 = vunpack.c.0.s8 %v239
      %v241 = vlaneseq
      %v242 = vshrl.u32 %v241, 7
      %v243 = vsub.s32 %v240, %v242
      %v244 = vrot.slane %v230, %v243
      %vm245 = vcmask 261120
      %v246 = vsel %vm245, %v237, 0
      %v249 = vsel %vm245, %v219, 0
      %251 = vmatprep.subr.mxu0 0.0
      %252 = vmatpush1.xpose.msra.mxu0 0.0
      %253 = vmatprep.subr.mxu0 0.0
      %254 = vmatpush1.xpose.msra.mxu0 0.0
      %255 = vmatprep.subr.mxu0 0.0
      %256 = vmatpush1.xpose.msra.mxu0 0.0
      %257 = vmatprep.subr.mxu0 0.0
      %258 = vmatpush1.xpose.msra.mxu0 0.0
      %259 = vmatprep.subr.mxu0 0.0
      %260 = vmatpush1.xpose.msra.mxu0 0.0
      %261 = vmatprep.subr.mxu0 0.0
      %262 = vmatpush1.xpose.msra.mxu0 0.0
      %263 = vmatprep.subr.mxu0 0.0
      %264 = vmatpush1.xpose.msra.mxu0 0.0
      %265 = vmatprep.subr.mxu0 0.0
      %266 = vmatpush1.xpose.msra.mxu0 0.0
      %267 = vmatprep.subr.mxu0 0.0
      %268 = vmatpush1.xpose.msra.mxu0 0.0
      %269 = vmatprep.subr.mxu0 0.0
      %270 = vmatpush1.xpose.msra.mxu0 0.0
      %271 = vmatprep.subr.mxu0 0.0
      %272 = vmatpush1.xpose.msra.mxu0 0.0
      %273 = vmatprep.subr.mxu0 0.0
      %274 = vmatpush1.xpose.msra.mxu0 0.0
      %275 = vmatprep.subr.mxu0 0.0
      %276 = vmatpush1.xpose.msra.mxu0 0.0
      %277 = vmatprep.subr.mxu0 0.0
      %278 = vmatpush1.xpose.msra.mxu0 0.0
      %279 = vmatprep.subr.mxu0 0.0
      %280 = vmatpush1.xpose.msra.mxu0 0.0
      %281 = vmatprep.subr.mxu0 0.0
      %282 = vmatpush1.xpose.msra.mxu0 %v249
      %283 = vmatprep.subr.mxu0 0.0
      %284 = vmatpush2.xpose.msra.mxu0 0.0
      %285 = vmatprep.subr.mxu0 0.0
      %286 = vmatpush2.xpose.msra.mxu0 0.0
      %287 = vmatprep.subr.mxu0 0.0
      %288 = vmatpush2.xpose.msra.mxu0 0.0
      %289 = vmatprep.subr.mxu0 0.0
      %290 = vmatpush2.xpose.msra.mxu0 0.0
      %291 = vmatprep.subr.mxu0 0.0
      %292 = vmatpush2.xpose.msra.mxu0 0.0
      %293 = vmatprep.subr.mxu0 0.0
      %294 = vmatpush2.xpose.msra.mxu0 0.0
      %295 = vmatprep.subr.mxu0 0.0
      %296 = vmatpush2.xpose.msra.mxu0 0.0
      %297 = vmatprep.subr.mxu0 0.0
      %298 = vmatpush2.xpose.msra.mxu0 0.0
      %299 = vmatprep.subr.mxu0 0.0
      %300 = vmatpush2.xpose.msra.mxu0 0.0
      %301 = vmatprep.subr.mxu0 0.0
      %302 = vmatpush2.xpose.msra.mxu0 0.0
      %303 = vmatprep.subr.mxu0 0.0
      %304 = vmatpush2.xpose.msra.mxu0 0.0
      %305 = vmatprep.subr.mxu0 0.0
      %306 = vmatpush2.xpose.msra.mxu0 0.0
      %307 = vmatprep.subr.mxu0 0.0
      %308 = vmatpush2.xpose.msra.mxu0 0.0
      %309 = vmatprep.subr.mxu0 0.0
      %310 = vmatpush2.xpose.msra.mxu0 0.0
      %311 = vmatprep.subr.mxu0 0.0
      %312 = vmatpush2.xpose.msra.mxu0 0.0
      %313 = vmatprep.subr.mxu0 0.0
      %314 = vmatpush2.xpose.msra.mxu0 0.0
      %315 = vmatprep.mubr.f32.mxu0 0.0
      %316 = vmatmul.mubr.f32.gmra.mxu0 %v246
      %v317 = vpop.f32.mrf.mxu0
      %v318 = vadd.f32 0.0, %v317
      %v319 = vpop.f32.mrf.mxu0
      %320 = vdwg.mxu0
      %v321 = vsel %vm245, %v244, 0
      %v324 = vsel %vm245, %v220, 0
      %326 = vmatprep.subr.mxu0 0.0
      %327 = vmatpush1.xpose.msra.mxu0 0.0
      %328 = vmatprep.subr.mxu0 0.0
      %329 = vmatpush1.xpose.msra.mxu0 0.0
      %330 = vmatprep.subr.mxu0 0.0
      %331 = vmatpush1.xpose.msra.mxu0 0.0
      %332 = vmatprep.subr.mxu0 0.0
      %333 = vmatpush1.xpose.msra.mxu0 0.0
      %334 = vmatprep.subr.mxu0 0.0
      %335 = vmatpush1.xpose.msra.mxu0 0.0
      %336 = vmatprep.subr.mxu0 0.0
      %337 = vmatpush1.xpose.msra.mxu0 0.0
      %338 = vmatprep.subr.mxu0 0.0
      %339 = vmatpush1.xpose.msra.mxu0 0.0
      %340 = vmatprep.subr.mxu0 0.0
      %341 = vmatpush1.xpose.msra.mxu0 0.0
      %342 = vmatprep.subr.mxu0 0.0
      %343 = vmatpush1.xpose.msra.mxu0 0.0
      %344 = vmatprep.subr.mxu0 0.0
      %345 = vmatpush1.xpose.msra.mxu0 0.0
      %346 = vmatprep.subr.mxu0 0.0
      %347 = vmatpush1.xpose.msra.mxu0 0.0
      %348 = vmatprep.subr.mxu0 0.0
      %349 = vmatpush1.xpose.msra.mxu0 0.0
      %350 = vmatprep.subr.mxu0 0.0
      %351 = vmatpush1.xpose.msra.mxu0 0.0
      %352 = vmatprep.subr.mxu0 0.0
      %353 = vmatpush1.xpose.msra.mxu0 0.0
      %354 = vmatprep.subr.mxu0 0.0
      %355 = vmatpush1.xpose.msra.mxu0 0.0
      %356 = vmatprep.subr.mxu0 0.0
      %357 = vmatpush1.xpose.msra.mxu0 %v324
      %358 = vmatprep.subr.mxu0 0.0
      %359 = vmatpush2.xpose.msra.mxu0 0.0
      %360 = vmatprep.subr.mxu0 0.0
      %361 = vmatpush2.xpose.msra.mxu0 0.0
      %362 = vmatprep.subr.mxu0 0.0
      %363 = vmatpush2.xpose.msra.mxu0 0.0
      %364 = vmatprep.subr.mxu0 0.0
      %365 = vmatpush2.xpose.msra.mxu0 0.0
      %366 = vmatprep.subr.mxu0 0.0
      %367 = vmatpush2.xpose.msra.mxu0 0.0
      %368 = vmatprep.subr.mxu0 0.0
      %369 = vmatpush2.xpose.msra.mxu0 0.0
      %370 = vmatprep.subr.mxu0 0.0
      %371 = vmatpush2.xpose.msra.mxu0 0.0
      %372 = vmatprep.subr.mxu0 0.0
      %373 = vmatpush2.xpose.msra.mxu0 0.0
      %374 = vmatprep.subr.mxu0 0.0
      %375 = vmatpush2.xpose.msra.mxu0 0.0
      %376 = vmatprep.subr.mxu0 0.0
      %377 = vmatpush2.xpose.msra.mxu0 0.0
      %378 = vmatprep.subr.mxu0 0.0
      %379 = vmatpush2.xpose.msra.mxu0 0.0
      %380 = vmatprep.subr.mxu0 0.0
      %381 = vmatpush2.xpose.msra.mxu0 0.0
      %382 = vmatprep.subr.mxu0 0.0
      %383 = vmatpush2.xpose.msra.mxu0 0.0
      %384 = vmatprep.subr.mxu0 0.0
      %385 = vmatpush2.xpose.msra.mxu0 0.0
      %386 = vmatprep.subr.mxu0 0.0
      %387 = vmatpush2.xpose.msra.mxu0 0.0
      %388 = vmatprep.subr.mxu0 0.0
      %389 = vmatpush2.xpose.msra.mxu0 0.0
      %390 = vmatprep.mubr.f32.mxu0 0.0
      %391 = vmatmul.mubr.f32.gmra.mxu0 %v321
      %v392 = vpop.f32.mrf.mxu0
      %v393 = vadd.f32 0.0, %v392
      %v394 = vpop.f32.mrf.mxu0
      %395 = vdwg.mxu0
      %v396 = vld [vmem:[%s109] sm:$0x3]
      %vm397 = vcmp.ne.f32.partialorder %v396, 0.0
      %v400 = vrot.slane %v393, 7
      %vm401 = vcmask 1041409
      %v402 = vsel %vm401, %v400, %v318
      %v404 = vsel %vm397, %v402, -1e+30
      %v405 = vld [vmem:[#allocation3] sm:$0x3]
      %vm406 = vcmask 58368
      %v407 = vsel %vm406, %v404, -inf
      %408 = vmax.xlane.f32.xlu0 %v407
      %v409 = vpop.xlane.xlu0 %408
      %v410 = vmax.f32 %v405, %v409
      %v411 = vsub.f32 %v405, %v410
      %v412 = vmul.f32 %v411, 1.442695
      %v413 = vpow.pop %v412
      %415 = vset.pattern.permute.xlu0 0
      %416 = vperm.xlu0 %415, %v410
      %v417 = vpop.permute.xlu0 %416
      %v419 = vsub.f32 %v404, %v417
      %v420 = vmul.f32 %v419, 1.442695
      %v421 = vpow.pop %v420
      %v422 = vld [vmem:[#allocation4] sm:$0x3]
      %v423 = vmul.f32 %v413, %v422
      %v424 = vsel %vm406, %v421, 0.0
      %425 = vadd.xlane.f32.xlu0 %v424
      %v426 = vpop.xlane.xlu0 %425
      %v427 = vadd.f32 %v423, %v426
      %vm428 = vcmask 1024
      %429 = vst.msk [vmem:[#allocation4] sm:$0x3] %vm428, %v427
      %v432 = vunpack.c.l.s4 1966171168
      %v433 = vunpack.c.0.s8 %v432
      %v434 = vlaneseq
      %v435 = vshrl.u32 %v434, 7
      %v436 = vsub.s32 %v433, %v435
      %v437 = vrot.slane %v421, %v436
      %v438 = vcombine.high %v437, %v437
      %v440 = vunpack.c.l.s4 1966171168
      %v441 = vunpack.c.0.s8 %v440
      %v442 = vlaneseq
      %v443 = vshrl.u32 %v442, 7
      %v444 = vsub.s32 %v441, %v443
      %v445 = vrot.slane %v437, %v444
      %v447 = vunpack.c.l.s4 1966171168
      %v448 = vunpack.c.0.s8 %v447
      %v449 = vlaneseq
      %v450 = vshrl.u32 %v449, 7
      %v451 = vsub.s32 %v448, %v450
      %v452 = vrot.slane %v438, %v451
      %vm453 = vcmask 64512
      %v454 = vsel %vm453, %v445, 0
      %456 = vmatprep.subr.mxu0 0.0
      %457 = vmatpush1.msra.mxu0 0.0
      %458 = vmatprep.subr.mxu0 0.0
      %459 = vmatpush1.msra.mxu0 0.0
      %460 = vmatprep.subr.mxu0 0.0
      %461 = vmatpush1.msra.mxu0 0.0
      %462 = vmatprep.subr.mxu0 0.0
      %463 = vmatpush1.msra.mxu0 0.0
      %464 = vmatprep.subr.mxu0 0.0
      %465 = vmatpush1.msra.mxu0 0.0
      %466 = vmatprep.subr.mxu0 0.0
      %467 = vmatpush1.msra.mxu0 0.0
      %468 = vmatprep.subr.mxu0 0.0
      %469 = vmatpush1.msra.mxu0 0.0
      %470 = vmatprep.subr.mxu0 0.0
      %471 = vmatpush1.msra.mxu0 0.0
      %472 = vmatprep.subr.mxu0 0.0
      %473 = vmatpush1.msra.mxu0 0.0
      %474 = vmatprep.subr.mxu0 0.0
      %475 = vmatpush1.msra.mxu0 0.0
      %476 = vmatprep.subr.mxu0 0.0
      %477 = vmatpush1.msra.mxu0 0.0
      %478 = vmatprep.subr.mxu0 0.0
      %479 = vmatpush1.msra.mxu0 0.0
      %480 = vmatprep.subr.mxu0 0.0
      %481 = vmatpush1.msra.mxu0 0.0
      %482 = vmatprep.subr.mxu0 0.0
      %483 = vmatpush1.msra.mxu0 0.0
      %484 = vmatprep.subr.mxu0 0.0
      %485 = vmatpush1.msra.mxu0 0.0
      %486 = vmatprep.subr.mxu0 0.0
      %487 = vmatpush1.msra.mxu0 %v219
      %488 = vmatprep.subr.mxu0 0.0
      %489 = vmatpush2.msra.mxu0 0.0
      %490 = vmatprep.subr.mxu0 0.0
      %491 = vmatpush2.msra.mxu0 0.0
      %492 = vmatprep.subr.mxu0 0.0
      %493 = vmatpush2.msra.mxu0 0.0
      %494 = vmatprep.subr.mxu0 0.0
      %495 = vmatpush2.msra.mxu0 0.0
      %496 = vmatprep.subr.mxu0 0.0
      %497 = vmatpush2.msra.mxu0 0.0
      %498 = vmatprep.subr.mxu0 0.0
      %499 = vmatpush2.msra.mxu0 0.0
      %500 = vmatprep.subr.mxu0 0.0
      %501 = vmatpush2.msra.mxu0 0.0
      %502 = vmatprep.subr.mxu0 0.0
      %503 = vmatpush2.msra.mxu0 0.0
      %504 = vmatprep.subr.mxu0 0.0
      %505 = vmatpush2.msra.mxu0 0.0
      %506 = vmatprep.subr.mxu0 0.0
      %507 = vmatpush2.msra.mxu0 0.0
      %508 = vmatprep.subr.mxu0 0.0
      %509 = vmatpush2.msra.mxu0 0.0
      %510 = vmatprep.subr.mxu0 0.0
      %511 = vmatpush2.msra.mxu0 0.0
      %512 = vmatprep.subr.mxu0 0.0
      %513 = vmatpush2.msra.mxu0 0.0
      %514 = vmatprep.subr.mxu0 0.0
      %515 = vmatpush2.msra.mxu0 0.0
      %516 = vmatprep.subr.mxu0 0.0
      %517 = vmatpush2.msra.mxu0 0.0
      %518 = vmatprep.subr.mxu0 0.0
      %519 = vmatpush2.msra.mxu0 0.0
      %520 = vmatprep.mubr.f32.mxu0 0.0
      %521 = vmatmul.mubr.f32.gmra.mxu0 %v454
      %v522 = vpop.f32.mrf.mxu0
      %v523 = vadd.f32 0.0, %v522
      %v524 = vpop.f32.mrf.mxu0
      %525 = vdwg.mxu0
      %v526 = vsel %vm453, %v452, 0
      %528 = vmatprep.subr.mxu0 0.0
      %529 = vmatpush1.msra.mxu0 0.0
      %530 = vmatprep.subr.mxu0 0.0
      %531 = vmatpush1.msra.mxu0 0.0
      %532 = vmatprep.subr.mxu0 0.0
      %533 = vmatpush1.msra.mxu0 0.0
      %534 = vmatprep.subr.mxu0 0.0
      %535 = vmatpush1.msra.mxu0 0.0
      %536 = vmatprep.subr.mxu0 0.0
      %537 = vmatpush1.msra.mxu0 0.0
      %538 = vmatprep.subr.mxu0 0.0
      %539 = vmatpush1.msra.mxu0 0.0
      %540 = vmatprep.subr.mxu0 0.0
      %541 = vmatpush1.msra.mxu0 0.0
      %542 = vmatprep.subr.mxu0 0.0
      %543 = vmatpush1.msra.mxu0 0.0
      %544 = vmatprep.subr.mxu0 0.0
      %545 = vmatpush1.msra.mxu0 0.0
      %546 = vmatprep.subr.mxu0 0.0
      %547 = vmatpush1.msra.mxu0 0.0
      %548 = vmatprep.subr.mxu0 0.0
      %549 = vmatpush1.msra.mxu0 0.0
      %550 = vmatprep.subr.mxu0 0.0
      %551 = vmatpush1.msra.mxu0 0.0
      %552 = vmatprep.subr.mxu0 0.0
      %553 = vmatpush1.msra.mxu0 0.0
      %554 = vmatprep.subr.mxu0 0.0
      %555 = vmatpush1.msra.mxu0 0.0
      %556 = vmatprep.subr.mxu0 0.0
      %557 = vmatpush1.msra.mxu0 0.0
      %558 = vmatprep.subr.mxu0 0.0
      %559 = vmatpush1.msra.mxu0 %v220
      %560 = vmatprep.subr.mxu0 0.0
      %561 = vmatpush2.msra.mxu0 0.0
      %562 = vmatprep.subr.mxu0 0.0
      %563 = vmatpush2.msra.mxu0 0.0
      %564 = vmatprep.subr.mxu0 0.0
      %565 = vmatpush2.msra.mxu0 0.0
      %566 = vmatprep.subr.mxu0 0.0
      %567 = vmatpush2.msra.mxu0 0.0
      %568 = vmatprep.subr.mxu0 0.0
      %569 = vmatpush2.msra.mxu0 0.0
      %570 = vmatprep.subr.mxu0 0.0
      %571 = vmatpush2.msra.mxu0 0.0
      %572 = vmatprep.subr.mxu0 0.0
      %573 = vmatpush2.msra.mxu0 0.0
      %574 = vmatprep.subr.mxu0 0.0
      %575 = vmatpush2.msra.mxu0 0.0
      %576 = vmatprep.subr.mxu0 0.0
      %577 = vmatpush2.msra.mxu0 0.0
      %578 = vmatprep.subr.mxu0 0.0
      %579 = vmatpush2.msra.mxu0 0.0
      %580 = vmatprep.subr.mxu0 0.0
      %581 = vmatpush2.msra.mxu0 0.0
      %582 = vmatprep.subr.mxu0 0.0
      %583 = vmatpush2.msra.mxu0 0.0
      %584 = vmatprep.subr.mxu0 0.0
      %585 = vmatpush2.msra.mxu0 0.0
      %586 = vmatprep.subr.mxu0 0.0
      %587 = vmatpush2.msra.mxu0 0.0
      %588 = vmatprep.subr.mxu0 0.0
      %589 = vmatpush2.msra.mxu0 0.0
      %590 = vmatprep.subr.mxu0 0.0
      %591 = vmatpush2.msra.mxu0 0.0
      %592 = vmatprep.mubr.f32.mxu0 0.0
      %593 = vmatmul.mubr.f32.gmra.mxu0 %v526
      %v594 = vpop.f32.mrf.mxu0
      %v595 = vadd.f32 0.0, %v594
      %v596 = vpop.f32.mrf.mxu0
      %597 = vdwg.mxu0
      %v598 = vld [vmem:[#allocation5] sm:$0x3]
      %600 = vset.pattern.permute.xlu0 0
      %601 = vperm.xlu0 %600, %v413
      %v602 = vpop.permute.xlu0 %601
      %v604 = vmul.f32 %v602, %v598
      %v607 = vrot.slane %v595, 7
      %v608 = vsel %vm401, %v607, %v523
      %v610 = vadd.f32 %v604, %v608
      %vm611 = vcmask 254976
      %612 = vst.msk [vmem:[#allocation5] sm:$0x3] %vm611, %v610
      %613 = vst.msk [vmem:[#allocation3] sm:$0x3] %vm428, %v410
    $region49: #{tpu_custom_call.1} parent=1 // pred_fallthru
      _
    // Predicated region
    $region50: #{tpu_custom_call.1} parent=1 // pred_check
      %p614 = pneg %p112
    $region51: #{tpu_custom_call.1} parent=1 // pred_check_branch
      %616 = sbr.rel (%p614) target = $region53
    $region52: #{tpu_custom_call.1} parent=1 // pred_region
      %v617 = vld [vmem:[#allocation5] sm:$0x3]
      %v618 = vld [vmem:[#allocation4] sm:$0x3]
      %620 = vset.pattern.permute.xlu0 0
      %621 = vperm.xlu0 %620, %v618
      %v622 = vpop.permute.xlu0 %621
      %v624 = vrcp.pop %v622
      %v625 = vmul.f32 %v617, %v624
      %v626 = vld [vmem:[#allocation15] sm:$0xff]
      %v627 = vld [vmem:[#allocation15 + $0x8] sm:$0xff]
      %v628 = vld [vmem:[#allocation9] sm:$0x3]
      %630 = vrot.lane.b32.xlu0 %v625, 32
      %v631 = vpop.permute.xlu0 %630
      %vm633 = vcmask 261120
      %v634 = vsel %vm633, %v628, %v631
      %vm635 = vcmask 523264
      %v637 = vsel %vm635, %v634, 0
      %v640 = vsel %vm635, %v626, 0
      %v643 = vsel %vm635, %v627, 0
      %645 = vmatprep.subr.mxu0 0.0
      %646 = vmatpush1.xpose.msra.mxu0 0.0
      %647 = vmatprep.subr.mxu0 0.0
      %648 = vmatpush1.xpose.msra.mxu0 0.0
      %649 = vmatprep.subr.mxu0 0.0
      %650 = vmatpush1.xpose.msra.mxu0 0.0
      %651 = vmatprep.subr.mxu0 0.0
      %652 = vmatpush1.xpose.msra.mxu0 0.0
      %653 = vmatprep.subr.mxu0 0.0
      %654 = vmatpush1.xpose.msra.mxu0 0.0
      %655 = vmatprep.subr.mxu0 0.0
      %656 = vmatpush1.xpose.msra.mxu0 0.0
      %657 = vmatprep.subr.mxu0 0.0
      %658 = vmatpush1.xpose.msra.mxu0 0.0
      %659 = vmatprep.subr.mxu0 0.0
      %660 = vmatpush1.xpose.msra.mxu0 0.0
      %661 = vmatprep.subr.mxu0 0.0
      %662 = vmatpush1.xpose.msra.mxu0 0.0
      %663 = vmatprep.subr.mxu0 0.0
      %664 = vmatpush1.xpose.msra.mxu0 0.0
      %665 = vmatprep.subr.mxu0 0.0
      %666 = vmatpush1.xpose.msra.mxu0 0.0
      %667 = vmatprep.subr.mxu0 0.0
      %668 = vmatpush1.xpose.msra.mxu0 0.0
      %669 = vmatprep.subr.mxu0 0.0
      %670 = vmatpush1.xpose.msra.mxu0 0.0
      %671 = vmatprep.subr.mxu0 0.0
      %672 = vmatpush1.xpose.msra.mxu0 0.0
      %673 = vmatprep.subr.mxu0 0.0
      %674 = vmatpush1.xpose.msra.mxu0 %v643
      %675 = vmatprep.subr.mxu0 0.0
      %676 = vmatpush1.xpose.msra.mxu0 %v640
      %677 = vmatprep.subr.mxu0 0.0
      %678 = vmatpush2.xpose.msra.mxu0 0.0
      %679 = vmatprep.subr.mxu0 0.0
      %680 = vmatpush2.xpose.msra.mxu0 0.0
      %681 = vmatprep.subr.mxu0 0.0
      %682 = vmatpush2.xpose.msra.mxu0 0.0
      %683 = vmatprep.subr.mxu0 0.0
      %684 = vmatpush2.xpose.msra.mxu0 0.0
      %685 = vmatprep.subr.mxu0 0.0
      %686 = vmatpush2.xpose.msra.mxu0 0.0
      %687 = vmatprep.subr.mxu0 0.0
      %688 = vmatpush2.xpose.msra.mxu0 0.0
      %689 = vmatprep.subr.mxu0 0.0
      %690 = vmatpush2.xpose.msra.mxu0 0.0
      %691 = vmatprep.subr.mxu0 0.0
      %692 = vmatpush2.xpose.msra.mxu0 0.0
      %693 = vmatprep.subr.mxu0 0.0
      %694 = vmatpush2.xpose.msra.mxu0 0.0
      %695 = vmatprep.subr.mxu0 0.0
      %696 = vmatpush2.xpose.msra.mxu0 0.0
      %697 = vmatprep.subr.mxu0 0.0
      %698 = vmatpush2.xpose.msra.mxu0 0.0
      %699 = vmatprep.subr.mxu0 0.0
      %700 = vmatpush2.xpose.msra.mxu0 0.0
      %701 = vmatprep.subr.mxu0 0.0
      %702 = vmatpush2.xpose.msra.mxu0 0.0
      %703 = vmatprep.subr.mxu0 0.0
      %704 = vmatpush2.xpose.msra.mxu0 0.0
      %705 = vmatprep.subr.mxu0 0.0
      %706 = vmatpush2.xpose.msra.mxu0 0.0
      %707 = vmatprep.subr.mxu0 0.0
      %708 = vmatpush2.xpose.msra.mxu0 0.0
      %709 = vmatprep.mubr.f32.mxu0 0.0
      %710 = vmatmul.mubr.f32.gmra.mxu0 %v637
      %v711 = vpop.f32.mrf.mxu0
      %v712 = vadd.f32 0.0, %v711
      %v713 = vpop.f32.mrf.mxu0
      %714 = vdwg.mxu0
      %v715 = vtanh.pop %v712
      %vm716 = vcmask 123904
      %717 = vst.msk [vmem:[#allocation17] sm:$0x3] %vm716, %v715
    $region53: #{tpu_custom_call.1} parent=1 // pred_fallthru
      _
    // Predicated region
    $region54: #{tpu_custom_call.1} parent=1 // pred_check
      _
    $region55: #{tpu_custom_call.1} parent=1 // pred_check_branch
      %719 = sbr.rel (0) target = $region57
    $region56: #{tpu_custom_call.1} parent=1 // pred_region
      %s721 = ssub.s32 32, 32
      %722 = vsyncadd [#allocation11], %s721
      %s724 = sshll.u32 [#allocation17], 4
      %s725 = int_to_ptr.vmem [resolvable:$true] %s724
      %727 = dma.vmem_to_hbm [thread:$0]  %s725, 32, %s8, [#allocation11]
    $region57: #{tpu_custom_call.1} parent=1 // pred_fallthru
      _
    // Predicated region
    $region58: #{tpu_custom_call.1} parent=1 // pred_check
      _
    $region59: #{tpu_custom_call.1} parent=1 // pred_check_branch
      %729 = sbr.rel (0) target = $region61
    $region60: #{tpu_custom_call.1} parent=1 // pred_region
      %730 = dma.done [#allocation11], 32
    $region61: #{tpu_custom_call.1} parent=1 // pred_fallthru
      _
    %731 = vsyncpa [#allocation10], 1
    %732 = vsyncpa [#allocation13], 1
    %733 = vsyncpa [#allocation16], 1
    %734 = vsyncpa [#allocation11], 1

</llo_original>
